<compile_context>
chip_gen: v6e
topology: v6e:2x2x1
jax: 0.10.0
libtpu: 0.0.40
codegen_flags: <defaults>
</compile_context>

<pallas_src>
import functools

import jax
import jax.numpy as jnp
from jax.experimental import pallas as pl
from jax.experimental.pallas import tpu as pltpu


def _round_up(x, m):
    return ((x + m - 1) // m) * m


def _dwconv_kernel(x_ref, w_ref, b_ref, o_ref, *, KH, KW, W, P_pad):
    # x_ref: (CK, L_in)   flattened (row width W), tail-padded input image
    # w_ref: (CK, KH*KW)  per-output-channel filter taps
    # b_ref: (CK, 1)      per-output-channel bias
    # o_ref: (CK, P_pad)  flattened stride-1 output (row width W), lane-dense
    wv = w_ref[...].astype(jnp.float32)          # one tiny load, resident
    bv = b_ref[...].astype(jnp.float32)          # (CK, 1)
    acc = jnp.zeros(o_ref.shape, jnp.float32)
    for i in range(KH):                          # static unroll over the window
        for j in range(KW):
            t = i * KW + j
            # Constant-offset, lane-contiguous slice of the flattened image.
            xs = x_ref[:, pl.ds(i * W + j, P_pad)].astype(jnp.float32)
            # (CK, 1) weight column lane-broadcast against (CK, P_pad).
            acc = acc + xs * wv[:, t:t + 1]
    o_ref[...] = (acc + bv).astype(o_ref.dtype)


def depthwise_conv2d_pallas(x, w, b, *, stride=1, padding=0):
    """x: (N, C, H, W) f32; w: (C, K, KH, KW) f32; b: (C*K,) f32 -> (N, C*K, OH, OW)."""
    N, C, H, W = x.shape
    Cw, K, KH, KW = w.shape
    assert Cw == C
    CK = C * K

    if padding:
        # TODO(synk): handle the halo inside the kernel (index_map offsets /
        # masked edge taps) to avoid materializing a padded copy of x in HBM.
        x = jnp.pad(x, ((0, 0), (0, 0), (padding, padding), (padding, padding)))
        H += 2 * padding
        W += 2 * padding

    # Stride-1 output extents; stride>1 is an exact subsample of this.
    OH1 = H - KH + 1
    OW1 = W - KW + 1
    OH = (H - KH) // stride + 1
    OW = (W - KW) // stride + 1

    # Lane-dense flattened layout: output flat index p = oh*W + ow, so every
    # tap (i, j) reads the input at the constant offset p + i*W + j.
    P1 = OH1 * W                          # stride-1 flattened output length
    P_pad = _round_up(P1, 128)            # unmasked full-lane stores
    L_in = _round_up((KH - 1) * W + (KW - 1) + P_pad, 128)

    # (N, C, H, W) -> (N, C*K, L_in): replicate each input channel K times so
    # output channel c*K + m (PyTorch grouped ordering) sits on its own sublane.
    x_flat = jnp.repeat(x.reshape(N, C, H * W), K, axis=1)
    x_flat = jnp.pad(x_flat, ((0, 0), (0, 0), (0, L_in - H * W)))

    w_flat = w.reshape(CK, KH * KW)       # row c*K+m, column i*KW+j
    b_col = b.reshape(CK, 1)

    kernel = functools.partial(_dwconv_kernel, KH=KH, KW=KW, W=W, P_pad=P_pad)

    elem_bytes = jnp.dtype(x.dtype).itemsize
    cost = pl.CostEstimate(
        flops=2 * N * CK * P_pad * KH * KW,
        transcendentals=0,
        bytes_accessed=(x_flat.size + w_flat.size + b_col.size
                        + N * CK * P_pad) * elem_bytes,
    )

    # NOTE: for large H*W the flattened spatial axis should be tiled in
    # multiples of 128 lanes (and sized against v7x's 64 MiB VMEM); at these
    # shapes a full image per grid step is a few KiB and fits trivially.
    out_flat = pl.pallas_call(
        kernel,
        out_shape=jax.ShapeDtypeStruct((N, CK, P_pad), x.dtype),
        grid=(N,),
        in_specs=[
            pl.BlockSpec((pl.Squeezed(), CK, L_in), lambda n: (n, 0, 0)),
            pl.BlockSpec((CK, KH * KW), lambda n: (0, 0)),
            pl.BlockSpec((CK, 1), lambda n: (0, 0)),
        ],
        out_specs=pl.BlockSpec((pl.Squeezed(), CK, P_pad), lambda n: (n, 0, 0)),
        compiler_params=pltpu.CompilerParams(
            dimension_semantics=("parallel",)),
        cost_estimate=cost,
    )(x_flat, w_flat, b_col)

    # Un-flatten (layout plumbing only): rows of width W, crop the KW-1 junk
    # columns per row and the padded rows, then apply the stride by subsampling.
    n_rows = P_pad // W
    out = out_flat[:, :, : n_rows * W].reshape(N, CK, n_rows, W)
    out = out[:, :, :OH1, :OW1]
    if stride != 1:
        out = out[:, :, ::stride, ::stride]
    return out


def depthwise_conv2d_ref(x, w, b, *, stride=1, padding=0):
    """Pure-JAX reference matching torch.nn.Conv2d(groups=C)."""
    C, K, KH, KW = w.shape
    w_oihw = w.reshape(C * K, 1, KH, KW)
    y = jax.lax.conv_general_dilated(
        x, w_oihw,
        window_strides=(stride, stride),
        padding=[(padding, padding), (padding, padding)],
        dimension_numbers=("NCHW", "OIHW", "NCHW"),
        feature_group_count=C)
    return y + b.reshape(1, C * K, 1, 1)


if __name__ == "__main__":
    # Module config: in_channels=4, multiplier_k=2, kernel_size=3, stride=1, pad=0
    N, C, K, H, W, KH = 2, 4, 2, 16, 16, 3
    KW = KH
    stride, padding = 1, 0

    key = jax.random.PRNGKey(0)
    kx, kw, kb = jax.random.split(key, 3)
    x = jax.random.normal(kx, (N, C, H, W), dtype=jnp.float32)
    fan_in = KH * KW
    w = jax.random.uniform(kw, (C, K, KH, KW), dtype=jnp.float32,
                           minval=-1.0, maxval=1.0) / fan_in
    b = jax.random.uniform(kb, (C * K,), dtype=jnp.float32,
                           minval=-0.1, maxval=0.1)

    run = jax.jit(functools.partial(depthwise_conv2d_pallas,
                                    stride=stride, padding=padding))
    out = run(x, w, b)
    out = jax.block_until_ready(out)

    ref = depthwise_conv2d_ref(x, w, b, stride=stride, padding=padding)
    assert out.shape == (N, C * K, H - KH + 1, W - KW + 1), out.shape
    assert jnp.allclose(out, ref, atol=1e-5, rtol=1e-5), "mismatch vs reference"

    print("KERNEL_OK")
</pallas_src>

<mosaic_0001>
module attributes {stable_mosaic.version = 11 : i64} {
  func.func @_dwconv_kernel(%arg0: i32, %arg1: memref<1x8x384xf32, #tpu.memory_space<vmem>>, %arg2: memref<8x9xf32, #tpu.memory_space<vmem>>, %arg3: memref<8x1xf32, #tpu.memory_space<vmem>>, %arg4: memref<1x8x256xf32, #tpu.memory_space<vmem>>) attributes {dimension_semantics = [#tpu.dimension_semantics<parallel>], iteration_bounds = array<i64: 2>, scalar_prefetch = 0 : i64, scratch_operands = 0 : i64, tpu.core_type = #tpu.core_type<tc>, window_params = [{transform_indices = @transform_0, window_bounds = array<i64: 1, 8, 384>}, {pipeline_mode = #tpu.pipeline_mode<synchronous>, transform_indices = @transform_1, window_bounds = array<i64: 8, 9>}, {pipeline_mode = #tpu.pipeline_mode<synchronous>, transform_indices = @transform_2, window_bounds = array<i64: 8, 1>}, {transform_indices = @transform_3, window_bounds = array<i64: 1, 8, 256>}]} {
    %c0 = arith.constant 0 : index
    %c0_0 = arith.constant 0 : index
    %0 = vector.load %arg2[%c0, %c0_0] : memref<8x9xf32, #tpu.memory_space<vmem>>, vector<8x9xf32>
    %c0_1 = arith.constant 0 : index
    %c0_2 = arith.constant 0 : index
    %1 = vector.load %arg3[%c0_1, %c0_2] : memref<8x1xf32, #tpu.memory_space<vmem>>, vector<8x1xf32>
    %cst = arith.constant 0.000000e+00 : f32
    %2 = vector.broadcast %cst : f32 to vector<8x256xf32>
    %c0_3 = arith.constant 0 : index
    %c0_4 = arith.constant 0 : index
    %c0_5 = arith.constant 0 : index
    %3 = vector.load %arg1[%c0_3, %c0_4, %c0_5] : memref<1x8x384xf32, #tpu.memory_space<vmem>>, vector<1x8x256xf32>
    %4 = vector.shape_cast %3 : vector<1x8x256xf32> to vector<8x256xf32>
    %5 = vector.extract_strided_slice %0 {offsets = [0, 0], sizes = [8, 1], strides = [1, 1]} : vector<8x9xf32> to vector<8x1xf32>
    %6 = vector.broadcast %5 : vector<8x1xf32> to vector<8x256xf32>
    %7 = arith.mulf %4, %6 : vector<8x256xf32>
    %8 = arith.addf %2, %7 : vector<8x256xf32>
    %c0_6 = arith.constant 0 : index
    %c0_7 = arith.constant 0 : index
    %c1 = arith.constant 1 : index
    %9 = vector.load %arg1[%c0_6, %c0_7, %c1] : memref<1x8x384xf32, #tpu.memory_space<vmem>>, vector<1x8x256xf32>
    %10 = vector.shape_cast %9 : vector<1x8x256xf32> to vector<8x256xf32>
    %11 = vector.extract_strided_slice %0 {offsets = [0, 1], sizes = [8, 1], strides = [1, 1]} : vector<8x9xf32> to vector<8x1xf32>
    %12 = vector.broadcast %11 : vector<8x1xf32> to vector<8x256xf32>
    %13 = arith.mulf %10, %12 : vector<8x256xf32>
    %14 = arith.addf %8, %13 : vector<8x256xf32>
    %c0_8 = arith.constant 0 : index
    %c0_9 = arith.constant 0 : index
    %c2 = arith.constant 2 : index
    %15 = vector.load %arg1[%c0_8, %c0_9, %c2] : memref<1x8x384xf32, #tpu.memory_space<vmem>>, vector<1x8x256xf32>
    %16 = vector.shape_cast %15 : vector<1x8x256xf32> to vector<8x256xf32>
    %17 = vector.extract_strided_slice %0 {offsets = [0, 2], sizes = [8, 1], strides = [1, 1]} : vector<8x9xf32> to vector<8x1xf32>
    %18 = vector.broadcast %17 : vector<8x1xf32> to vector<8x256xf32>
    %19 = arith.mulf %16, %18 : vector<8x256xf32>
    %20 = arith.addf %14, %19 : vector<8x256xf32>
    %c0_10 = arith.constant 0 : index
    %c0_11 = arith.constant 0 : index
    %c16 = arith.constant 16 : index
    %21 = vector.load %arg1[%c0_10, %c0_11, %c16] : memref<1x8x384xf32, #tpu.memory_space<vmem>>, vector<1x8x256xf32>
    %22 = vector.shape_cast %21 : vector<1x8x256xf32> to vector<8x256xf32>
    %23 = vector.extract_strided_slice %0 {offsets = [0, 3], sizes = [8, 1], strides = [1, 1]} : vector<8x9xf32> to vector<8x1xf32>
    %24 = vector.broadcast %23 : vector<8x1xf32> to vector<8x256xf32>
    %25 = arith.mulf %22, %24 : vector<8x256xf32>
    %26 = arith.addf %20, %25 : vector<8x256xf32>
    %c0_12 = arith.constant 0 : index
    %c0_13 = arith.constant 0 : index
    %c17 = arith.constant 17 : index
    %27 = vector.load %arg1[%c0_12, %c0_13, %c17] : memref<1x8x384xf32, #tpu.memory_space<vmem>>, vector<1x8x256xf32>
    %28 = vector.shape_cast %27 : vector<1x8x256xf32> to vector<8x256xf32>
    %29 = vector.extract_strided_slice %0 {offsets = [0, 4], sizes = [8, 1], strides = [1, 1]} : vector<8x9xf32> to vector<8x1xf32>
    %30 = vector.broadcast %29 : vector<8x1xf32> to vector<8x256xf32>
    %31 = arith.mulf %28, %30 : vector<8x256xf32>
    %32 = arith.addf %26, %31 : vector<8x256xf32>
    %c0_14 = arith.constant 0 : index
    %c0_15 = arith.constant 0 : index
    %c18 = arith.constant 18 : index
    %33 = vector.load %arg1[%c0_14, %c0_15, %c18] : memref<1x8x384xf32, #tpu.memory_space<vmem>>, vector<1x8x256xf32>
    %34 = vector.shape_cast %33 : vector<1x8x256xf32> to vector<8x256xf32>
    %35 = vector.extract_strided_slice %0 {offsets = [0, 5], sizes = [8, 1], strides = [1, 1]} : vector<8x9xf32> to vector<8x1xf32>
    %36 = vector.broadcast %35 : vector<8x1xf32> to vector<8x256xf32>
    %37 = arith.mulf %34, %36 : vector<8x256xf32>
    %38 = arith.addf %32, %37 : vector<8x256xf32>
    %c0_16 = arith.constant 0 : index
    %c0_17 = arith.constant 0 : index
    %c32 = arith.constant 32 : index
    %39 = vector.load %arg1[%c0_16, %c0_17, %c32] : memref<1x8x384xf32, #tpu.memory_space<vmem>>, vector<1x8x256xf32>
    %40 = vector.shape_cast %39 : vector<1x8x256xf32> to vector<8x256xf32>
    %41 = vector.extract_strided_slice %0 {offsets = [0, 6], sizes = [8, 1], strides = [1, 1]} : vector<8x9xf32> to vector<8x1xf32>
    %42 = vector.broadcast %41 : vector<8x1xf32> to vector<8x256xf32>
    %43 = arith.mulf %40, %42 : vector<8x256xf32>
    %44 = arith.addf %38, %43 : vector<8x256xf32>
    %c0_18 = arith.constant 0 : index
    %c0_19 = arith.constant 0 : index
    %c33 = arith.constant 33 : index
    %45 = vector.load %arg1[%c0_18, %c0_19, %c33] : memref<1x8x384xf32, #tpu.memory_space<vmem>>, vector<1x8x256xf32>
    %46 = vector.shape_cast %45 : vector<1x8x256xf32> to vector<8x256xf32>
    %47 = vector.extract_strided_slice %0 {offsets = [0, 7], sizes = [8, 1], strides = [1, 1]} : vector<8x9xf32> to vector<8x1xf32>
    %48 = vector.broadcast %47 : vector<8x1xf32> to vector<8x256xf32>
    %49 = arith.mulf %46, %48 : vector<8x256xf32>
    %50 = arith.addf %44, %49 : vector<8x256xf32>
    %c0_20 = arith.constant 0 : index
    %c0_21 = arith.constant 0 : index
    %c34 = arith.constant 34 : index
    %51 = vector.load %arg1[%c0_20, %c0_21, %c34] : memref<1x8x384xf32, #tpu.memory_space<vmem>>, vector<1x8x256xf32>
    %52 = vector.shape_cast %51 : vector<1x8x256xf32> to vector<8x256xf32>
    %53 = vector.extract_strided_slice %0 {offsets = [0, 8], sizes = [8, 1], strides = [1, 1]} : vector<8x9xf32> to vector<8x1xf32>
    %54 = vector.broadcast %53 : vector<8x1xf32> to vector<8x256xf32>
    %55 = arith.mulf %52, %54 : vector<8x256xf32>
    %56 = arith.addf %50, %55 : vector<8x256xf32>
    %57 = vector.broadcast %1 : vector<8x1xf32> to vector<8x256xf32>
    %58 = arith.addf %56, %57 : vector<8x256xf32>
    %c0_22 = arith.constant 0 : index
    %c0_23 = arith.constant 0 : index
    %c0_24 = arith.constant 0 : index
    %59 = vector.load %arg4[%c0_22, %c0_23, %c0_24] : memref<1x8x256xf32, #tpu.memory_space<vmem>>, vector<1x8x256xf32>
    %60 = vector.shape_cast %59 : vector<1x8x256xf32> to vector<8x256xf32>
    %61 = vector.shape_cast %58 : vector<8x256xf32> to vector<1x8x256xf32>
    tpu.vector_store %arg4[%c0_22, %c0_23, %c0_24], %61 {strides = array<i32>} : memref<1x8x256xf32, #tpu.memory_space<vmem>>, vector<1x8x256xf32>,
    return
  }
  func.func @transform_0(%arg0: i32) -> (i32, i32, i32) {
    %c0_i32 = arith.constant 0 : i32
    %c0_i32_0 = arith.constant 0 : i32
    %c0_i32_1 = arith.constant 0 : i32
    return %arg0, %c0_i32, %c0_i32_0 : i32, i32, i32
  }
  func.func @transform_1(%arg0: i32) -> (i32, i32) {
    %c0_i32 = arith.constant 0 : i32
    %c0_i32_0 = arith.constant 0 : i32
    %c0_i32_1 = arith.constant 0 : i32
    return %c0_i32, %c0_i32_0 : i32, i32
  }
  func.func @transform_2(%arg0: i32) -> (i32, i32) {
    %c0_i32 = arith.constant 0 : i32
    %c0_i32_0 = arith.constant 0 : i32
    %c0_i32_1 = arith.constant 0 : i32
    return %c0_i32, %c0_i32_0 : i32, i32
  }
  func.func @transform_3(%arg0: i32) -> (i32, i32, i32) {
    %c0_i32 = arith.constant 0 : i32
    %c0_i32_0 = arith.constant 0 : i32
    %c0_i32_1 = arith.constant 0 : i32
    return %arg0, %c0_i32, %c0_i32_0 : i32, i32, i32
  }
}

</mosaic_0001>

<llo_original>
// kernel: depthwise_conv2d_pallas.1
$region0: #{depthwise_conv2d_pallas.1}
  #allocation0 [shape = 'u32[]', space=smem, size = 0x4, offset = 0x4, fixed_abs, tag = 'smem constant byte address 0x4 - core index']
  #allocation1 [shape = 'u32[144,128]{1,0:T(1,128)}', space=vmem, size = 0x12000, scoped, tag = 'internal scratch']
  %s0 = inlined_call_operand.vmem [shape: f32[2,8,384], index: 0, kind: input, shape index: {}]
  %s1 = inlined_call_operand.vmem [shape: f32[8,9], index: 1, kind: input, shape index: {}]
  %s2 = inlined_call_operand.vmem [shape: f32[8,1], index: 2, kind: input, shape index: {}]
  %s3 = inlined_call_operand.vmem [shape: f32[2,8,256], index: 3, kind: output, shape index: {}]
  %s4 = sld [smem:[#allocation0]]
  $region45: #{depthwise_conv2d_pallas.1} parent=0
    _
  %s6 = ssub.s32 1, %s4
  %s7 = scalar_select 0, %s6, %s4
  loop: start=0, step=1, limit=4
  $region2: #{depthwise_conv2d_pallas.1} parent=0 // loop_pre_header
    _
  $region3: #{depthwise_conv2d_pallas.1} parent=0 // loop_header
    %s9 = sphi 0, %s13
    %p10 = scmp.ge.s32.totalorder %s9, 4
    %s19 = sphi 0, %s21
    %s22 = sphi 0, %s19
    %s23 = sphi 0, %s22
    %s39 = sphi 0, %s23
    %s43 = sphi 0, %s43
    %s45 = sphi 0, %s43
    %s46 = sphi 0, %s45
    %s60 = sphi 0, %s46
    %s64 = sphi 0, %s64
    %s66 = sphi 0, %s64
    %s67 = sphi 0, %s66
    %s81 = sphi 0, %s67
    %s87 = sphi 0, %s89
    %s90 = sphi 0, %s87
    %s91 = sphi 0, %s90
    %s107 = sphi 0, %s91
  $region4: #{depthwise_conv2d_pallas.1} parent=0 // loop_header_branch
    %12 = sbr.rel (%p10) target = $region8
  $region5: #{depthwise_conv2d_pallas.1} parent=0 // loop_body
    %s14 = ssub.s32 %s9, 1
    %s15 = ssub.s32 %s9, 2
    %s16 = sadd.s32 %s9, 1
    %s17 = ssub.s32 %s9, %s16
    %p18 = scmp.eq.s32.totalorder %s17, 0
    %s20 = sadd.s32 %s19, 1
    %s21 = scalar_select %p18, %s19, %s20
    %p24 = pneg %p18
    %p25 = scmp.eq.s32.totalorder %s9, 1
    %p26 = por %p24, %p25
    %p27 = scmp.ne.s32.totalorder %s19, %s22
    %p28 = scmp.eq.s32.totalorder %s9, 0
    %p29 = por %p27, %p28
    %p30 = scmp.ne.s32.totalorder %s19, %s22
    %p31 = scmp.eq.s32.totalorder %s14, 1
    %p32 = por %p30, %p31
    %p33 = scmp.ne.s32.totalorder %s22, %s23
    %p34 = scmp.eq.s32.totalorder %s14, 0
    %p35 = por %p33, %p34
    %p36 = scmp.ne.s32.totalorder %s22, %s23
    %p37 = scmp.eq.s32.totalorder %s15, 1
    %p38 = por %p36, %p37
    %p40 = scmp.ne.s32.totalorder %s23, %s39
    %p41 = scmp.eq.s32.totalorder %s15, 0
    %p42 = por %p40, %p41
    %s44 = sadd.s32 %s43, 1
    %p47 = scmp.eq.s32.totalorder %s9, 1
    %p48 = scmp.ne.s32.totalorder %s43, %s45
    %p49 = scmp.eq.s32.totalorder %s9, 0
    %p50 = por %p48, %p49
    %p51 = scmp.ne.s32.totalorder %s43, %s45
    %p52 = scmp.eq.s32.totalorder %s14, 1
    %p53 = por %p51, %p52
    %p54 = scmp.ne.s32.totalorder %s45, %s46
    %p55 = scmp.eq.s32.totalorder %s14, 0
    %p56 = por %p54, %p55
    %p57 = scmp.ne.s32.totalorder %s45, %s46
    %p58 = scmp.eq.s32.totalorder %s15, 1
    %p59 = por %p57, %p58
    %p61 = scmp.ne.s32.totalorder %s46, %s60
    %p62 = scmp.eq.s32.totalorder %s15, 0
    %p63 = por %p61, %p62
    %s65 = sadd.s32 %s64, 1
    %p68 = scmp.eq.s32.totalorder %s9, 1
    %p69 = scmp.ne.s32.totalorder %s64, %s66
    %p70 = scmp.eq.s32.totalorder %s9, 0
    %p71 = por %p69, %p70
    %p72 = scmp.ne.s32.totalorder %s64, %s66
    %p73 = scmp.eq.s32.totalorder %s14, 1
    %p74 = por %p72, %p73
    %p75 = scmp.ne.s32.totalorder %s66, %s67
    %p76 = scmp.eq.s32.totalorder %s14, 0
    %p77 = por %p75, %p76
    %p78 = scmp.ne.s32.totalorder %s66, %s67
    %p79 = scmp.eq.s32.totalorder %s15, 1
    %p80 = por %p78, %p79
    %p82 = scmp.ne.s32.totalorder %s67, %s81
    %p83 = scmp.eq.s32.totalorder %s15, 0
    %p84 = por %p82, %p83
    %s85 = ssub.s32 %s9, %s16
    %p86 = scmp.eq.s32.totalorder %s85, 0
    %s88 = sadd.s32 %s87, 1
    %s89 = scalar_select %p86, %s87, %s88
    %p92 = pneg %p86
    %p93 = scmp.eq.s32.totalorder %s9, 1
    %p94 = por %p92, %p93
    %p95 = scmp.ne.s32.totalorder %s87, %s90
    %p96 = scmp.eq.s32.totalorder %s9, 0
    %p97 = por %p95, %p96
    %p98 = scmp.ne.s32.totalorder %s87, %s90
    %p99 = scmp.eq.s32.totalorder %s14, 1
    %p100 = por %p98, %p99
    %p101 = scmp.ne.s32.totalorder %s90, %s91
    %p102 = scmp.eq.s32.totalorder %s14, 0
    %p103 = por %p101, %p102
    %p104 = scmp.ne.s32.totalorder %s90, %s91
    %p105 = scmp.eq.s32.totalorder %s15, 1
    %p106 = por %p104, %p105
    %p108 = scmp.ne.s32.totalorder %s91, %s107
    %p109 = scmp.eq.s32.totalorder %s15, 0
    %p110 = por %p108, %p109
    %p111 = scmp.le.s32.totalorder 1, %s9
    %p112 = scmp.lt.s32.totalorder %s9, 3
    %p113 = pnand %p111, %p112
    %p114 = pneg %p113
    // Predicated region
    $region9: #{depthwise_conv2d_pallas.1} parent=5 // pred_check
      _
    $region10: #{depthwise_conv2d_pallas.1} parent=5 // pred_check_branch
      %116 = sbr.rel (%p113) target = $region12
    $region11: #{depthwise_conv2d_pallas.1} parent=5 // pred_region
      %s117 = ssub.s32 %s9, 1
      // Predicated region
      $region13: #{depthwise_conv2d_pallas.1} parent=11 // pred_check
        %p118 = pneg %p56
      $region14: #{depthwise_conv2d_pallas.1} parent=11 // pred_check_branch
        %120 = sbr.rel (%p118) target = $region16
      $region15: #{depthwise_conv2d_pallas.1} parent=11 // pred_region
        _
      $region16: #{depthwise_conv2d_pallas.1} parent=11 // pred_fallthru
        _
      // Predicated region
      $region17: #{depthwise_conv2d_pallas.1} parent=11 // pred_check
        %p121 = pneg %p77
      $region18: #{depthwise_conv2d_pallas.1} parent=11 // pred_check_branch
        %123 = sbr.rel (%p121) target = $region20
      $region19: #{depthwise_conv2d_pallas.1} parent=11 // pred_region
        _
      $region20: #{depthwise_conv2d_pallas.1} parent=11 // pred_fallthru
        _
    $region12: #{depthwise_conv2d_pallas.1} parent=5 // pred_fallthru
      _
    %p124 = scmp.lt.s32.totalorder %s9, 2
    // Predicated region
    $region21: #{depthwise_conv2d_pallas.1} parent=5 // pred_check
      %p125 = pneg %p124
    $region22: #{depthwise_conv2d_pallas.1} parent=5 // pred_check_branch
      %127 = sbr.rel (%p125) target = $region24
    $region23: #{depthwise_conv2d_pallas.1} parent=5 // pred_region
      // Predicated region
      $region25: #{depthwise_conv2d_pallas.1} parent=23 // pred_check
        %p128 = pneg %p29
      $region26: #{depthwise_conv2d_pallas.1} parent=23 // pred_check_branch
        %130 = sbr.rel (%p128) target = $region28
      $region27: #{depthwise_conv2d_pallas.1} parent=23 // pred_region
        %p131 = scmp.lt.s32.totalorder %s9, 1
        %s132 = scalar_select %p131, %s9, 1
        %s133 = smul.addr %s132, 3
        %s134 = smul.addr %s133, 8
        %s135 = scalar_lea.vmem %s0, %s134
      $region28: #{depthwise_conv2d_pallas.1} parent=23 // pred_fallthru
        _
    $region24: #{depthwise_conv2d_pallas.1} parent=5 // pred_fallthru
      _
    %p136 = scmp.le.s32.totalorder 1, %s9
    %p137 = scmp.lt.s32.totalorder %s9, 3
    %p138 = pnand %p136, %p137
    %p139 = pneg %p138
    // Predicated region
    $region29: #{depthwise_conv2d_pallas.1} parent=5 // pred_check
      _
    $region30: #{depthwise_conv2d_pallas.1} parent=5 // pred_check_branch
      %141 = sbr.rel (%p138) target = $region32
    $region31: #{depthwise_conv2d_pallas.1} parent=5 // pred_region
      %s142 = ssub.s32 %s9, 1
      %p143 = scmp.lt.s32.totalorder %s14, 1
      %s144 = scalar_select %p143, %s14, 1
      %s145 = smul.addr %s144, 3
      %s146 = smul.addr %s145, 8
      %s147 = scalar_lea.vmem %s0, %s146
      %p148 = pneg %p35
      %p149 = pneg %p32
      %p150 = pneg %p56
      %p151 = pneg %p53
      %p152 = pneg %p77
      %p153 = pneg %p74
      %p154 = pneg %p103
      %p155 = pneg %p100
      %p156 = scmp.lt.s32.totalorder %s14, 1
      %s157 = scalar_select %p156, %s14, 1
      %s158 = smul.addr %s157, 2
      %s159 = smul.addr %s158, 8
      %s160 = scalar_lea.vmem %s3, %s159
      %p161 = scmp.lt.s32.totalorder %s14, 1
      %s162 = scalar_select %p161, %s14, 1
      %s163 = smul.addr %s162, 3
      %s164 = smul.addr %s163, 8
      %s165 = scalar_lea.vmem %s0, %s164
      %p166 = scmp.lt.s32.totalorder %s14, 1
      %s167 = scalar_select %p166, %s14, 1
      %s168 = smul.addr %s167, 2
      %s169 = smul.addr %s168, 8
      %s170 = scalar_lea.vmem %s3, %s169
      %v171 = vld [vmem:[%s1] sm:$0xff]
      %v172 = vld [vmem:[%s2] sm:$0xff]
      %v173 = vld [vmem:[%s165] sm:$0xff]
      %v174 = vld [vmem:[%s165 + $0x8] sm:$0xff]
      %176 = vset.pattern.permute.xlu0 0
      %177 = vperm.xlu0 %176, %v171
      %v178 = vpop.permute.xlu0 %177
      %v180 = vmul.f32 %v173, %v178
      %v181 = vmul.f32 %v174, %v178
      %v182 = vadd.f32 %v180, 0.0
      %v183 = vadd.f32 %v181, 0.0
      %v184 = vld [vmem:[%s165] sm:$0xff]
      %v185 = vld [vmem:[%s165 + $0x8] sm:$0xff]
      %v186 = vld [vmem:[%s165 + $0x10] sm:$0xff]
      %187 = vset.pattern.permute.xlu0 1
      %188 = vperm.xlu0 %187, %v171
      %v189 = vpop.permute.xlu0 %188
      %v191 = vmul.f32 %v184, %v189
      %v192 = vmul.f32 %v185, %v189
      %v193 = vmul.f32 %v186, %v189
      %197 = vrot.lane.b32.xlu0 %v191, 127
      %v198 = vpop.permute.xlu0 %197
      %199 = vrot.lane.b32.xlu0 %v192, 127
      %v200 = vpop.permute.xlu0 %199
      %201 = vrot.lane.b32.xlu0 %v193, 127
      %v202 = vpop.permute.xlu0 %201
      %vm203 = vcmask 1039360
      %v204 = vsel %vm203, %v198, %v200
      %v205 = vsel %vm203, %v200, %v202
      %v208 = vadd.f32 %v182, %v204
      %v209 = vadd.f32 %v183, %v205
      %210 = vset.pattern.permute.xlu0 2
      %211 = vperm.xlu0 %210, %v171
      %v212 = vpop.permute.xlu0 %211
      %v214 = vmul.f32 %v184, %v212
      %v215 = vmul.f32 %v185, %v212
      %v216 = vmul.f32 %v186, %v212
      %220 = vrot.lane.b32.xlu0 %v214, 126
      %v221 = vpop.permute.xlu0 %220
      %222 = vrot.lane.b32.xlu0 %v215, 126
      %v223 = vpop.permute.xlu0 %222
      %224 = vrot.lane.b32.xlu0 %v216, 126
      %v225 = vpop.permute.xlu0 %224
      %vm226 = vcmask 1031168
      %v227 = vsel %vm226, %v221, %v223
      %v228 = vsel %vm226, %v223, %v225
      %v231 = vadd.f32 %v208, %v227
      %v232 = vadd.f32 %v209, %v228
      %233 = vset.pattern.permute.xlu0 3
      %234 = vperm.xlu0 %233, %v171
      %v235 = vpop.permute.xlu0 %234
      %v237 = vmul.f32 %v184, %v235
      %v238 = vmul.f32 %v185, %v235
      %v239 = vmul.f32 %v186, %v235
      %243 = vrot.lane.b32.xlu0 %v237, 112
      %v244 = vpop.permute.xlu0 %243
      %245 = vrot.lane.b32.xlu0 %v238, 112
      %v246 = vpop.permute.xlu0 %245
      %247 = vrot.lane.b32.xlu0 %v239, 112
      %v248 = vpop.permute.xlu0 %247
      %vm249 = vcmask 916480
      %v250 = vsel %vm249, %v244, %v246
      %v251 = vsel %vm249, %v246, %v248
      %v254 = vadd.f32 %v231, %v250
      %v255 = vadd.f32 %v232, %v251
      %256 = vset.pattern.permute.xlu0 4
      %257 = vperm.xlu0 %256, %v171
      %v258 = vpop.permute.xlu0 %257
      %v260 = vmul.f32 %v184, %v258
      %v261 = vmul.f32 %v185, %v258
      %v262 = vmul.f32 %v186, %v258
      %266 = vrot.lane.b32.xlu0 %v260, 111
      %v267 = vpop.permute.xlu0 %266
      %268 = vrot.lane.b32.xlu0 %v261, 111
      %v269 = vpop.permute.xlu0 %268
      %270 = vrot.lane.b32.xlu0 %v262, 111
      %v271 = vpop.permute.xlu0 %270
      %vm272 = vcmask 908288
      %v273 = vsel %vm272, %v267, %v269
      %v274 = vsel %vm272, %v269, %v271
      %v277 = vadd.f32 %v254, %v273
      %v278 = vadd.f32 %v255, %v274
      %279 = vset.pattern.permute.xlu0 5
      %280 = vperm.xlu0 %279, %v171
      %v281 = vpop.permute.xlu0 %280
      %v283 = vmul.f32 %v184, %v281
      %v284 = vmul.f32 %v185, %v281
      %v285 = vmul.f32 %v186, %v281
      %289 = vrot.lane.b32.xlu0 %v283, 110
      %v290 = vpop.permute.xlu0 %289
      %291 = vrot.lane.b32.xlu0 %v284, 110
      %v292 = vpop.permute.xlu0 %291
      %293 = vrot.lane.b32.xlu0 %v285, 110
      %v294 = vpop.permute.xlu0 %293
      %vm295 = vcmask 900096
      %v296 = vsel %vm295, %v290, %v292
      %v297 = vsel %vm295, %v292, %v294
      %v300 = vadd.f32 %v277, %v296
      %v301 = vadd.f32 %v278, %v297
      %302 = vset.pattern.permute.xlu0 6
      %303 = vperm.xlu0 %302, %v171
      %v304 = vpop.permute.xlu0 %303
      %v306 = vmul.f32 %v184, %v304
      %v307 = vmul.f32 %v185, %v304
      %v308 = vmul.f32 %v186, %v304
      %312 = vrot.lane.b32.xlu0 %v306, 96
      %v313 = vpop.permute.xlu0 %312
      %314 = vrot.lane.b32.xlu0 %v307, 96
      %v315 = vpop.permute.xlu0 %314
      %316 = vrot.lane.b32.xlu0 %v308, 96
      %v317 = vpop.permute.xlu0 %316
      %vm318 = vcmask 785408
      %v319 = vsel %vm318, %v313, %v315
      %v320 = vsel %vm318, %v315, %v317
      %v323 = vadd.f32 %v300, %v319
      %v324 = vadd.f32 %v301, %v320
      %325 = vset.pattern.permute.xlu0 7
      %326 = vperm.xlu0 %325, %v171
      %v327 = vpop.permute.xlu0 %326
      %v329 = vmul.f32 %v184, %v327
      %v330 = vmul.f32 %v185, %v327
      %v331 = vmul.f32 %v186, %v327
      %335 = vrot.lane.b32.xlu0 %v329, 95
      %v336 = vpop.permute.xlu0 %335
      %337 = vrot.lane.b32.xlu0 %v330, 95
      %v338 = vpop.permute.xlu0 %337
      %339 = vrot.lane.b32.xlu0 %v331, 95
      %v340 = vpop.permute.xlu0 %339
      %vm341 = vcmask 777216
      %v342 = vsel %vm341, %v336, %v338
      %v343 = vsel %vm341, %v338, %v340
      %v346 = vadd.f32 %v323, %v342
      %v347 = vadd.f32 %v324, %v343
      %348 = vset.pattern.permute.xlu0 8
      %349 = vperm.xlu0 %348, %v171
      %v350 = vpop.permute.xlu0 %349
      %v352 = vmul.f32 %v184, %v350
      %v353 = vmul.f32 %v185, %v350
      %v354 = vmul.f32 %v186, %v350
      %358 = vrot.lane.b32.xlu0 %v352, 94
      %v359 = vpop.permute.xlu0 %358
      %360 = vrot.lane.b32.xlu0 %v353, 94
      %v361 = vpop.permute.xlu0 %360
      %362 = vrot.lane.b32.xlu0 %v354, 94
      %v363 = vpop.permute.xlu0 %362
      %vm364 = vcmask 769024
      %v365 = vsel %vm364, %v359, %v361
      %v366 = vsel %vm364, %v361, %v363
      %v369 = vadd.f32 %v346, %v365
      %v370 = vadd.f32 %v347, %v366
      %372 = vset.pattern.permute.xlu0 0
      %373 = vperm.xlu0 %372, %v172
      %v374 = vpop.permute.xlu0 %373
      %v376 = vadd.f32 %v369, %v374
      %v377 = vadd.f32 %v370, %v374
      %378 = vst [vmem:[%s170] sm:$0xff] %v376
      %379 = vst [vmem:[%s170 + $0x8] sm:$0xff] %v377
      %p380 = scmp.lt.s32.totalorder %s14, 1
      %s381 = scalar_select %p380, %s14, 1
      %s382 = smul.addr %s381, 2
      %s383 = smul.addr %s382, 8
      %s384 = scalar_lea.vmem %s3, %s383
      // Predicated region
      $region33: #{depthwise_conv2d_pallas.1} parent=31 // pred_check
        %p385 = pneg %p100
      $region34: #{depthwise_conv2d_pallas.1} parent=31 // pred_check_branch
        %387 = sbr.rel (%p385) target = $region36
      $region35: #{depthwise_conv2d_pallas.1} parent=31 // pred_region
        _
      $region36: #{depthwise_conv2d_pallas.1} parent=31 // pred_fallthru
        _
    $region32: #{depthwise_conv2d_pallas.1} parent=5 // pred_fallthru
      _
    %p388 = scmp.le.s32.totalorder 2, %s9
    // Predicated region
    $region37: #{depthwise_conv2d_pallas.1} parent=5 // pred_check
      %p389 = pneg %p388
    $region38: #{depthwise_conv2d_pallas.1} parent=5 // pred_check_branch
      %391 = sbr.rel (%p389) target = $region40
    $region39: #{depthwise_conv2d_pallas.1} parent=5 // pred_region
      %s392 = ssub.s32 %s9, 2
      // Predicated region
      $region41: #{depthwise_conv2d_pallas.1} parent=39 // pred_check
        %p393 = pneg %p106
      $region42: #{depthwise_conv2d_pallas.1} parent=39 // pred_check_branch
        %395 = sbr.rel (%p393) target = $region44
      $region43: #{depthwise_conv2d_pallas.1} parent=39 // pred_region
        %p396 = scmp.lt.s32.totalorder %s15, 1
        %s397 = scalar_select %p396, %s15, 1
        %s398 = smul.addr %s397, 2
        %s399 = smul.addr %s398, 8
        %s400 = scalar_lea.vmem %s3, %s399
      $region44: #{depthwise_conv2d_pallas.1} parent=39 // pred_fallthru
        _
    $region40: #{depthwise_conv2d_pallas.1} parent=5 // pred_fallthru
      _
  $region6: #{depthwise_conv2d_pallas.1} parent=0 // loop_footer
    %s13 = sadd.s32 1, %s9
  $region7: #{depthwise_conv2d_pallas.1} parent=0 // loop_footer_branch
    %8 = sbr.rel target = $region3
  $region8: #{depthwise_conv2d_pallas.1} parent=0 // loop_exit
    _

</llo_original>
